<compile_context>
chip_gen: v6e
topology: v6e:2x2x1
jax: 0.10.0
libtpu: 0.0.40
codegen_flags: <defaults>
</compile_context>

<pallas_src>
import math

import jax
import jax.numpy as jnp
from jax.experimental import pallas as pl
from jax.experimental.pallas import tpu as pltpu

_INV_SQRT2 = 1.0 / math.sqrt(2.0)
_SQRT_2_OVER_PI = math.sqrt(2.0 / math.pi)
_LN_EPS = 1e-12


def _round_up(x, m):
    return ((x + m - 1) // m) * m


def _vmem_capacity_bytes():
    """Physical VMEM bytes for this chip; conservative 64 MiB (v7x) fallback."""
    try:
        info = pltpu.get_tpu_info()
        return int(getattr(info, "vmem_capacity_bytes", 64 << 20))
    except Exception:
        return 64 << 20


def _make_kernel(true_hid, padded_hid, use_tanh_gelu):
    """true_hid = real 2H for LayerNorm stats; padded_hid = lane-padded width."""
    inv_hid = 1.0 / float(true_hid)
    needs_mask = padded_hid != true_hid

    def kernel(text_ref, arch_ref, w1_ref, b1_ref, gamma_ref, beta_ref,
               mask_ref, w2_ref, b2_ref, out_ref):
        # Fused pooled product (dropout == identity at inference).
        x = text_ref[...] * arch_ref[...]                               # (TB, Hp) f32

        # Linear 1 on the MXU: bf16 feeds, f32 accumulation.
        h = jnp.dot(x.astype(jnp.bfloat16), w1_ref[...],
                    preferred_element_type=jnp.float32) + b1_ref[...]

        # GeLU in f32.  tanh form routes the transcendental to the EUP slot
        # (the kernel is otherwise VALU-bound); erf form matches PyTorch exactly.
        if use_tanh_gelu:
            inner = _SQRT_2_OVER_PI * (h + 0.044715 * (h * h * h))
            h = 0.5 * h * (1.0 + jnp.tanh(inner))
        else:
            h = h * 0.5 * (1.0 + jax.lax.erf(h * _INV_SQRT2))

        # BertLayerNorm over the TRUE hidden width (biased variance, eps in sqrt).
        # Padded lanes of h are exactly zero (zero-padded w1 columns / b1 and
        # GeLU(0)=0), so the plain sum already equals the sum over the true
        # width; only the centered deviations need the precomputed 0/1 mask.
        u = jnp.sum(h, axis=-1, keepdims=True) * inv_hid
        d = h - u
        if needs_mask:
            d = d * mask_ref[...]
        s = jnp.sum(d * d, axis=-1, keepdims=True) * inv_hid
        hn = d * jax.lax.rsqrt(s + _LN_EPS)
        hn = gamma_ref[...] * hn + beta_ref[...]

        # Linear 2 on the MXU: bf16 feeds, f32 accumulation, lane-dense store.
        out_ref[...] = (jnp.dot(hn.astype(jnp.bfloat16), w2_ref[...],
                                preferred_element_type=jnp.float32)
                        + b2_ref[...]).astype(out_ref.dtype)

    return kernel


def _choose_batch_tile(b, hp, hidp, ap, weight_bytes, vmem_cap):
    """Largest batch tile whose live set fits this chip's VMEM (weights resident)."""
    limit_cap = int(0.75 * vmem_cap)
    # Per-row f32 bytes: double-buffered in/out activation tiles plus ~6
    # HIDp-wide f32 temporaries (h, gelu temps, d, hn, bf16 staging, slack).
    per_row = 2 * (2 * hp * 4) + 2 * ap * 4 + 6 * hidp * 4
    budget = max(4 << 20, limit_cap - weight_bytes - (2 << 20))   # headroom
    tb = budget // per_row

    b8 = _round_up(b, 8)
    if b >= 16:
        # Guarantee >= 2 grid steps so v7x's second TensorCore has work
        # (harmless on single-core v5e/v6e).
        tb = min(tb, max(8, b8 // 2))
    tb = min(tb, b8, 4096)
    tb = max(tb, 8)
    if tb >= 256:
        tb = (tb // 256) * 256          # MXU-height aligned M tiles
    else:
        tb = (tb // 8) * 8
    return max(tb, 8)


def prepare_params(params):
    """One-time prep: lane-dense padding + bf16 weight storage (done once, not
    per forward call).  Weights stored (in_features, out_features)."""
    H, hid = params["w1"].shape
    A = params["w2"].shape[1]
    Hp = _round_up(H, 128)
    HIDp = _round_up(hid, 128)
    Ap = _round_up(A, 128)

    def pad2(a, rows, cols, dtype):
        a = jnp.asarray(a, jnp.float32)
        a = jnp.pad(a, ((0, rows - a.shape[0]), (0, cols - a.shape[1])))
        return a.astype(dtype)

    lane = jnp.arange(HIDp, dtype=jnp.int32)
    mask = (lane < hid).astype(jnp.float32).reshape(1, HIDp)

    return {
        "H": H, "hid": hid, "A": A, "Hp": Hp, "HIDp": HIDp, "Ap": Ap,
        "w1": pad2(params["w1"], Hp, HIDp, jnp.bfloat16),
        "b1": pad2(params["b1"], 1, HIDp, jnp.float32),
        "gamma": pad2(params["gamma"], 1, HIDp, jnp.float32),
        "beta": pad2(params["beta"], 1, HIDp, jnp.float32),
        "mask": mask,
        "w2": pad2(params["w2"], HIDp, Ap, jnp.bfloat16),
        "b2": pad2(params["b2"], 1, Ap, jnp.float32),
    }


def archbert_qa_forward(pooled_text, pooled_arch, prep, use_tanh_gelu=True):
    """pooled_text / pooled_arch: (B, H) float32.  Returns (B, A) float32."""
    B, H = pooled_text.shape
    assert H == prep["H"], "hidden size mismatch with prepared params"
    Hp, HIDp, Ap = prep["Hp"], prep["HIDp"], prep["Ap"]
    hid, A = prep["hid"], prep["A"]

    weight_keys = ("w1", "b1", "gamma", "beta", "mask", "w2", "b2")
    weight_bytes = sum(int(prep[k].size) * prep[k].dtype.itemsize for k in weight_keys)

    vmem_cap = _vmem_capacity_bytes()
    TB = _choose_batch_tile(B, Hp, HIDp, Ap, weight_bytes, vmem_cap)
    Bp = _round_up(B, TB)
    grid = (Bp // TB,)

    def pad_act(a):
        a = jnp.asarray(a, jnp.float32)
        return jnp.pad(a, ((0, Bp - a.shape[0]), (0, Hp - a.shape[1])))

    text_p = pad_act(pooled_text)
    arch_p = pad_act(pooled_arch)

    # VMEM accounting: single-buffered weights + double-buffered act tiles
    # + in-kernel f32 temporaries, capped at 0.75 * physical VMEM.
    act_bytes = 2 * (2 * TB * Hp * 4) + 2 * TB * Ap * 4
    tmp_bytes = 6 * TB * HIDp * 4
    limit_cap = int(0.75 * vmem_cap)
    vmem_limit = int(min(limit_cap,
                         max(32 << 20,
                             int(1.25 * (weight_bytes + act_bytes + tmp_bytes)))))

    cost = pl.CostEstimate(
        flops=2 * Bp * (Hp * HIDp + HIDp * Ap),
        transcendentals=Bp * HIDp,
        bytes_accessed=int(text_p.nbytes + arch_p.nbytes + weight_bytes + Bp * Ap * 4),
    )

    kernel = _make_kernel(hid, HIDp, use_tanh_gelu)

    def run(single_buffer_weights):
        kw = {"pipeline_mode": pl.Buffered(1)} if single_buffer_weights else {}
        # Batch tiles stream through the grid (pipelined, megacore-parallel);
        # weights/biases map to block (0, 0) every step -> VMEM-resident.
        act_in = pl.BlockSpec((TB, Hp), lambda i: (i, 0))
        w1_spec = pl.BlockSpec((Hp, HIDp), lambda i: (0, 0), **kw)
        vec_hid = pl.BlockSpec((1, HIDp), lambda i: (0, 0), **kw)
        w2_spec = pl.BlockSpec((HIDp, Ap), lambda i: (0, 0), **kw)
        vec_out = pl.BlockSpec((1, Ap), lambda i: (0, 0), **kw)
        out_spec = pl.BlockSpec((TB, Ap), lambda i: (i, 0))
        return pl.pallas_call(
            kernel,
            out_shape=jax.ShapeDtypeStruct((Bp, Ap), jnp.float32),
            grid=grid,
            in_specs=[act_in, act_in, w1_spec, vec_hid, vec_hid, vec_hid,
                      vec_hid, w2_spec, vec_out],
            out_specs=out_spec,
            compiler_params=pltpu.CompilerParams(
                dimension_semantics=("parallel",),
                vmem_limit_bytes=vmem_limit),
            cost_estimate=cost,
        )(text_p, arch_p, prep["w1"], prep["b1"], prep["gamma"], prep["beta"],
          prep["mask"], prep["w2"], prep["b2"])

    try:
        out_padded = run(True)
    except Exception:
        # Fallback for jaxlibs that reject Buffered(1) on invariant operands.
        out_padded = run(False)

    return out_padded[:B, :A]


def init_params(key, hidden_size, num_answers):
    """Deterministic synthetic init matching the module's parameter shapes
    (weights stored (in_features, out_features), i.e. torch weight transposed)."""
    hid = hidden_size * 2
    k1, k2, k3, k4 = jax.random.split(key, 4)
    return {
        "w1": jax.random.normal(k1, (hidden_size, hid), jnp.float32) / math.sqrt(hidden_size),
        "b1": jax.random.normal(k2, (1, hid), jnp.float32) * 0.01,
        "gamma": jnp.ones((1, hid), jnp.float32),
        "beta": jnp.zeros((1, hid), jnp.float32),
        "w2": jax.random.normal(k3, (hid, num_answers), jnp.float32) / math.sqrt(hid),
        "b2": jax.random.normal(k4, (1, num_answers), jnp.float32) * 0.01,
    }


def reference_forward(pooled_text, pooled_arch, params, matmul_dtype=jnp.float32,
                      use_tanh_gelu=False):
    """Pure-JAX reference; matmul_dtype=bfloat16 mirrors the kernel's MXU feeds."""
    x = pooled_text * pooled_arch
    h = jnp.dot(x.astype(matmul_dtype), params["w1"].astype(matmul_dtype),
                preferred_element_type=jnp.float32) + params["b1"]
    if use_tanh_gelu:
        h = 0.5 * h * (1.0 + jnp.tanh(_SQRT_2_OVER_PI * (h + 0.044715 * h ** 3)))
    else:
        h = h * 0.5 * (1.0 + jax.lax.erf(h * _INV_SQRT2))
    u = jnp.mean(h, axis=-1, keepdims=True)
    s = jnp.mean((h - u) ** 2, axis=-1, keepdims=True)
    h = (h - u) / jnp.sqrt(s + _LN_EPS)
    h = params["gamma"] * h + params["beta"]
    return (jnp.dot(h.astype(matmul_dtype), params["w2"].astype(matmul_dtype),
                    preferred_element_type=jnp.float32) + params["b2"])


if __name__ == "__main__":
    # Small shapes consistent with the module: batch=2, hidden=32, num_answers=128.
    B, H, A = 2, 32, 128
    key = jax.random.PRNGKey(0)
    kp, kt, ka = jax.random.split(key, 3)

    raw_params = init_params(kp, H, A)
    prep = prepare_params(raw_params)            # one-time pad + bf16 cast
    pooled_text = jax.random.normal(kt, (B, H), jnp.float32)
    pooled_arch = jax.random.normal(ka, (B, H), jnp.float32)

    out = jax.block_until_ready(
        archbert_qa_forward(pooled_text, pooled_arch, prep, use_tanh_gelu=True))
    assert out.shape == (B, A)

    # Tight check vs a reference with identical numerics (bf16 feeds, tanh GeLU).
    ref_same = reference_forward(pooled_text, pooled_arch, raw_params,
                                 jnp.bfloat16, use_tanh_gelu=True)
    assert jnp.allclose(out, ref_same, atol=2e-3, rtol=2e-3), \
        "mismatch vs matched-numerics reference"

    # Loose check vs the exact f32 module semantics (erf GeLU); covers bf16
    # quantization plus the tanh-GeLU approximation (~1e-3).
    ref_f32 = reference_forward(pooled_text, pooled_arch, raw_params,
                                jnp.float32, use_tanh_gelu=False)
    assert jnp.allclose(out, ref_f32, atol=7e-2, rtol=7e-2), \
        "mismatch vs f32 reference"

    print("KERNEL_OK")
</pallas_src>

<mosaic_0001>
module attributes {stable_mosaic.version = 11 : i64} {
  func.func @kernel(%arg0: i32, %arg1: memref<8x128xf32, #tpu.memory_space<vmem>>, %arg2: memref<8x128xf32, #tpu.memory_space<vmem>>, %arg3: memref<128x128xbf16, #tpu.memory_space<vmem>>, %arg4: memref<1x128xf32, #tpu.memory_space<vmem>>, %arg5: memref<1x128xf32, #tpu.memory_space<vmem>>, %arg6: memref<1x128xf32, #tpu.memory_space<vmem>>, %arg7: memref<1x128xf32, #tpu.memory_space<vmem>>, %arg8: memref<128x128xbf16, #tpu.memory_space<vmem>>, %arg9: memref<1x128xf32, #tpu.memory_space<vmem>>, %arg10: memref<8x128xf32, #tpu.memory_space<vmem>>) attributes {dimension_semantics = [#tpu.dimension_semantics<parallel>], iteration_bounds = array<i64: 1>, scalar_prefetch = 0 : i64, scratch_operands = 0 : i64, tpu.core_type = #tpu.core_type<tc>, window_params = [{transform_indices = @transform_0, window_bounds = array<i64: 8, 128>}, {transform_indices = @transform_1, window_bounds = array<i64: 8, 128>}, {pipeline_mode = #tpu.pipeline_mode<synchronous>, transform_indices = @transform_2, window_bounds = array<i64: 128, 128>}, {pipeline_mode = #tpu.pipeline_mode<synchronous>, transform_indices = @transform_3, window_bounds = array<i64: 1, 128>}, {pipeline_mode = #tpu.pipeline_mode<synchronous>, transform_indices = @transform_4, window_bounds = array<i64: 1, 128>}, {pipeline_mode = #tpu.pipeline_mode<synchronous>, transform_indices = @transform_5, window_bounds = array<i64: 1, 128>}, {pipeline_mode = #tpu.pipeline_mode<synchronous>, transform_indices = @transform_6, window_bounds = array<i64: 1, 128>}, {pipeline_mode = #tpu.pipeline_mode<synchronous>, transform_indices = @transform_7, window_bounds = array<i64: 128, 128>}, {pipeline_mode = #tpu.pipeline_mode<synchronous>, transform_indices = @transform_8, window_bounds = array<i64: 1, 128>}, {transform_indices = @transform_9, window_bounds = array<i64: 8, 128>}]} {
    %c0 = arith.constant 0 : index
    %c0_0 = arith.constant 0 : index
    %0 = vector.load %arg1[%c0, %c0_0] : memref<8x128xf32, #tpu.memory_space<vmem>>, vector<8x128xf32>
    %c0_1 = arith.constant 0 : index
    %c0_2 = arith.constant 0 : index
    %1 = vector.load %arg2[%c0_1, %c0_2] : memref<8x128xf32, #tpu.memory_space<vmem>>, vector<8x128xf32>
    %2 = arith.mulf %0, %1 : vector<8x128xf32>
    %3 = arith.truncf %2 : vector<8x128xf32> to vector<8x128xbf16>
    %c0_3 = arith.constant 0 : index
    %c0_4 = arith.constant 0 : index
    %4 = vector.load %arg3[%c0_3, %c0_4] : memref<128x128xbf16, #tpu.memory_space<vmem>>, vector<128x128xbf16>
    %cst = arith.constant dense<0.000000e+00> : vector<8x128xf32>
    %5 = tpu.matmul %3, %4, %cst {dimension_numbers = #tpu.dot_dimension_numbers<[1], [0], [0], [1], [0, 0, 1, 1], [], []>} : vector<8x128xbf16>, vector<128x128xbf16>, vector<8x128xf32> -> vector<8x128xf32>
    %c0_5 = arith.constant 0 : index
    %c0_6 = arith.constant 0 : index
    %6 = vector.load %arg4[%c0_5, %c0_6] : memref<1x128xf32, #tpu.memory_space<vmem>>, vector<1x128xf32>
    %7 = vector.broadcast %6 : vector<1x128xf32> to vector<8x128xf32>
    %8 = arith.addf %5, %7 : vector<8x128xf32>
    %9 = arith.mulf %8, %8 : vector<8x128xf32>
    %10 = arith.mulf %9, %8 : vector<8x128xf32>
    %cst_7 = arith.constant 4.471500e-02 : f32
    %11 = vector.broadcast %cst_7 : f32 to vector<8x128xf32>
    %12 = arith.mulf %11, %10 : vector<8x128xf32>
    %13 = arith.addf %8, %12 : vector<8x128xf32>
    %cst_8 = arith.constant 0.797884583 : f32
    %14 = vector.broadcast %cst_8 : f32 to vector<8x128xf32>
    %15 = arith.mulf %14, %13 : vector<8x128xf32>
    %cst_9 = arith.constant 5.000000e-01 : f32
    %16 = vector.broadcast %cst_9 : f32 to vector<8x128xf32>
    %17 = arith.mulf %16, %8 : vector<8x128xf32>
    %18 = math.tanh %15 : vector<8x128xf32>
    %cst_10 = arith.constant 1.000000e+00 : f32
    %19 = vector.broadcast %cst_10 : f32 to vector<8x128xf32>
    %20 = arith.addf %19, %18 : vector<8x128xf32>
    %21 = arith.mulf %17, %20 : vector<8x128xf32>
    %cst_11 = arith.constant dense<0.000000e+00> : vector<8xf32>
    %22 = vector.multi_reduction <add>, %21, %cst_11 [1] : vector<8x128xf32> to vector<8xf32>
    %23 = vector.shape_cast %22 : vector<8xf32> to vector<8x1xf32>
    %cst_12 = arith.constant 1.562500e-02 : f32
    %24 = vector.broadcast %cst_12 : f32 to vector<8x1xf32>
    %25 = arith.mulf %23, %24 : vector<8x1xf32>
    %26 = vector.broadcast %25 : vector<8x1xf32> to vector<8x128xf32>
    %27 = arith.subf %21, %26 : vector<8x128xf32>
    %c0_13 = arith.constant 0 : index
    %c0_14 = arith.constant 0 : index
    %28 = vector.load %arg7[%c0_13, %c0_14] : memref<1x128xf32, #tpu.memory_space<vmem>>, vector<1x128xf32>
    %29 = vector.broadcast %28 : vector<1x128xf32> to vector<8x128xf32>
    %30 = arith.mulf %27, %29 : vector<8x128xf32>
    %31 = arith.mulf %30, %30 : vector<8x128xf32>
    %cst_15 = arith.constant dense<0.000000e+00> : vector<8xf32>
    %32 = vector.multi_reduction <add>, %31, %cst_15 [1] : vector<8x128xf32> to vector<8xf32>
    %33 = vector.shape_cast %32 : vector<8xf32> to vector<8x1xf32>
    %cst_16 = arith.constant 1.562500e-02 : f32
    %34 = vector.broadcast %cst_16 : f32 to vector<8x1xf32>
    %35 = arith.mulf %33, %34 : vector<8x1xf32>
    %cst_17 = arith.constant 9.99999996E-13 : f32
    %36 = vector.broadcast %cst_17 : f32 to vector<8x1xf32>
    %37 = arith.addf %35, %36 : vector<8x1xf32>
    %38 = math.rsqrt %37 : vector<8x1xf32>
    %39 = vector.broadcast %38 : vector<8x1xf32> to vector<8x128xf32>
    %40 = arith.mulf %30, %39 : vector<8x128xf32>
    %c0_18 = arith.constant 0 : index
    %c0_19 = arith.constant 0 : index
    %41 = vector.load %arg5[%c0_18, %c0_19] : memref<1x128xf32, #tpu.memory_space<vmem>>, vector<1x128xf32>
    %42 = vector.broadcast %41 : vector<1x128xf32> to vector<8x128xf32>
    %43 = arith.mulf %42, %40 : vector<8x128xf32>
    %c0_20 = arith.constant 0 : index
    %c0_21 = arith.constant 0 : index
    %44 = vector.load %arg6[%c0_20, %c0_21] : memref<1x128xf32, #tpu.memory_space<vmem>>, vector<1x128xf32>
    %45 = vector.broadcast %44 : vector<1x128xf32> to vector<8x128xf32>
    %46 = arith.addf %43, %45 : vector<8x128xf32>
    %47 = arith.truncf %46 : vector<8x128xf32> to vector<8x128xbf16>
    %c0_22 = arith.constant 0 : index
    %c0_23 = arith.constant 0 : index
    %48 = vector.load %arg8[%c0_22, %c0_23] : memref<128x128xbf16, #tpu.memory_space<vmem>>, vector<128x128xbf16>
    %cst_24 = arith.constant dense<0.000000e+00> : vector<8x128xf32>
    %49 = tpu.matmul %47, %48, %cst_24 {dimension_numbers = #tpu.dot_dimension_numbers<[1], [0], [0], [1], [0, 0, 1, 1], [], []>} : vector<8x128xbf16>, vector<128x128xbf16>, vector<8x128xf32> -> vector<8x128xf32>
    %c0_25 = arith.constant 0 : index
    %c0_26 = arith.constant 0 : index
    %50 = vector.load %arg9[%c0_25, %c0_26] : memref<1x128xf32, #tpu.memory_space<vmem>>, vector<1x128xf32>
    %51 = vector.broadcast %50 : vector<1x128xf32> to vector<8x128xf32>
    %52 = arith.addf %49, %51 : vector<8x128xf32>
    %c0_27 = arith.constant 0 : index
    %c0_28 = arith.constant 0 : index
    %53 = vector.load %arg10[%c0_27, %c0_28] : memref<8x128xf32, #tpu.memory_space<vmem>>, vector<8x128xf32>
    tpu.vector_store %arg10[%c0_27, %c0_28], %52 {strides = array<i32>} : memref<8x128xf32, #tpu.memory_space<vmem>>, vector<8x128xf32>,
    return
  }
  func.func @transform_0(%arg0: i32) -> (i32, i32) {
    %c0_i32 = arith.constant 0 : i32
    %c0_i32_0 = arith.constant 0 : i32
    return %arg0, %c0_i32 : i32, i32
  }
  func.func @transform_1(%arg0: i32) -> (i32, i32) {
    %c0_i32 = arith.constant 0 : i32
    %c0_i32_0 = arith.constant 0 : i32
    return %arg0, %c0_i32 : i32, i32
  }
  func.func @transform_2(%arg0: i32) -> (i32, i32) {
    %c0_i32 = arith.constant 0 : i32
    %c0_i32_0 = arith.constant 0 : i32
    %c0_i32_1 = arith.constant 0 : i32
    return %c0_i32, %c0_i32_0 : i32, i32
  }
  func.func @transform_3(%arg0: i32) -> (i32, i32) {
    %c0_i32 = arith.constant 0 : i32
    %c0_i32_0 = arith.constant 0 : i32
    %c0_i32_1 = arith.constant 0 : i32
    return %c0_i32, %c0_i32_0 : i32, i32
  }
  func.func @transform_4(%arg0: i32) -> (i32, i32) {
    %c0_i32 = arith.constant 0 : i32
    %c0_i32_0 = arith.constant 0 : i32
    %c0_i32_1 = arith.constant 0 : i32
    return %c0_i32, %c0_i32_0 : i32, i32
  }
  func.func @transform_5(%arg0: i32) -> (i32, i32) {
    %c0_i32 = arith.constant 0 : i32
    %c0_i32_0 = arith.constant 0 : i32
    %c0_i32_1 = arith.constant 0 : i32
    return %c0_i32, %c0_i32_0 : i32, i32
  }
  func.func @transform_6(%arg0: i32) -> (i32, i32) {
    %c0_i32 = arith.constant 0 : i32
    %c0_i32_0 = arith.constant 0 : i32
    %c0_i32_1 = arith.constant 0 : i32
    return %c0_i32, %c0_i32_0 : i32, i32
  }
  func.func @transform_7(%arg0: i32) -> (i32, i32) {
    %c0_i32 = arith.constant 0 : i32
    %c0_i32_0 = arith.constant 0 : i32
    %c0_i32_1 = arith.constant 0 : i32
    return %c0_i32, %c0_i32_0 : i32, i32
  }
  func.func @transform_8(%arg0: i32) -> (i32, i32) {
    %c0_i32 = arith.constant 0 : i32
    %c0_i32_0 = arith.constant 0 : i32
    %c0_i32_1 = arith.constant 0 : i32
    return %c0_i32, %c0_i32_0 : i32, i32
  }
  func.func @transform_9(%arg0: i32) -> (i32, i32) {
    %c0_i32 = arith.constant 0 : i32
    %c0_i32_0 = arith.constant 0 : i32
    return %arg0, %c0_i32 : i32, i32
  }
}

module attributes {stable_mosaic.version = 11 : i64} {
  func.func @kernel(%arg0: i32, %arg1: memref<8x128xf32, #tpu.memory_space<vmem>>, %arg2: memref<8x128xf32, #tpu.memory_space<vmem>>, %arg3: memref<128x128xbf16, #tpu.memory_space<vmem>>, %arg4: memref<1x128xf32, #tpu.memory_space<vmem>>, %arg5: memref<1x128xf32, #tpu.memory_space<vmem>>, %arg6: memref<1x128xf32, #tpu.memory_space<vmem>>, %arg7: memref<1x128xf32, #tpu.memory_space<vmem>>, %arg8: memref<128x128xbf16, #tpu.memory_space<vmem>>, %arg9: memref<1x128xf32, #tpu.memory_space<vmem>>, %arg10: memref<8x128xf32, #tpu.memory_space<vmem>>) attributes {dimension_semantics = [#tpu.dimension_semantics<parallel>], iteration_bounds = array<i64: 1>, scalar_prefetch = 0 : i64, scratch_operands = 0 : i64, tpu.core_type = #tpu.core_type<tc>, window_params = [{transform_indices = @transform_0, window_bounds = array<i64: 8, 128>}, {transform_indices = @transform_1, window_bounds = array<i64: 8, 128>}, {pipeline_mode = #tpu.pipeline_mode<synchronous>, transform_indices = @transform_2, window_bounds = array<i64: 128, 128>}, {pipeline_mode = #tpu.pipeline_mode<synchronous>, transform_indices = @transform_3, window_bounds = array<i64: 1, 128>}, {pipeline_mode = #tpu.pipeline_mode<synchronous>, transform_indices = @transform_4, window_bounds = array<i64: 1, 128>}, {pipeline_mode = #tpu.pipeline_mode<synchronous>, transform_indices = @transform_5, window_bounds = array<i64: 1, 128>}, {pipeline_mode = #tpu.pipeline_mode<synchronous>, transform_indices = @transform_6, window_bounds = array<i64: 1, 128>}, {pipeline_mode = #tpu.pipeline_mode<synchronous>, transform_indices = @transform_7, window_bounds = array<i64: 128, 128>}, {pipeline_mode = #tpu.pipeline_mode<synchronous>, transform_indices = @transform_8, window_bounds = array<i64: 1, 128>}, {transform_indices = @transform_9, window_bounds = array<i64: 8, 128>}]} {
    %c0 = arith.constant 0 : index
    %c0_0 = arith.constant 0 : index
    %0 = vector.load %arg1[%c0, %c0_0] : memref<8x128xf32, #tpu.memory_space<vmem>>, vector<8x128xf32>
    %c0_1 = arith.constant 0 : index
    %c0_2 = arith.constant 0 : index
    %1 = vector.load %arg2[%c0_1, %c0_2] : memref<8x128xf32, #tpu.memory_space<vmem>>, vector<8x128xf32>
    %2 = arith.mulf %0, %1 : vector<8x128xf32>
    %3 = arith.truncf %2 : vector<8x128xf32> to vector<8x128xbf16>
    %c0_3 = arith.constant 0 : index
    %c0_4 = arith.constant 0 : index
    %4 = vector.load %arg3[%c0_3, %c0_4] : memref<128x128xbf16, #tpu.memory_space<vmem>>, vector<128x128xbf16>
    %cst = arith.constant dense<0.000000e+00> : vector<8x128xf32>
    %5 = tpu.matmul %3, %4, %cst {dimension_numbers = #tpu.dot_dimension_numbers<[1], [0], [0], [1], [0, 0, 1, 1], [], []>} : vector<8x128xbf16>, vector<128x128xbf16>, vector<8x128xf32> -> vector<8x128xf32>
    %c0_5 = arith.constant 0 : index
    %c0_6 = arith.constant 0 : index
    %6 = vector.load %arg4[%c0_5, %c0_6] : memref<1x128xf32, #tpu.memory_space<vmem>>, vector<1x128xf32>
    %7 = vector.broadcast %6 : vector<1x128xf32> to vector<8x128xf32>
    %8 = arith.addf %5, %7 : vector<8x128xf32>
    %9 = arith.mulf %8, %8 : vector<8x128xf32>
    %10 = arith.mulf %9, %8 : vector<8x128xf32>
    %cst_7 = arith.constant 4.471500e-02 : f32
    %11 = vector.broadcast %cst_7 : f32 to vector<8x128xf32>
    %12 = arith.mulf %11, %10 : vector<8x128xf32>
    %13 = arith.addf %8, %12 : vector<8x128xf32>
    %cst_8 = arith.constant 0.797884583 : f32
    %14 = vector.broadcast %cst_8 : f32 to vector<8x128xf32>
    %15 = arith.mulf %14, %13 : vector<8x128xf32>
    %cst_9 = arith.constant 5.000000e-01 : f32
    %16 = vector.broadcast %cst_9 : f32 to vector<8x128xf32>
    %17 = arith.mulf %16, %8 : vector<8x128xf32>
    %18 = math.tanh %15 : vector<8x128xf32>
    %cst_10 = arith.constant 1.000000e+00 : f32
    %19 = vector.broadcast %cst_10 : f32 to vector<8x128xf32>
    %20 = arith.addf %19, %18 : vector<8x128xf32>
    %21 = arith.mulf %17, %20 : vector<8x128xf32>
    %cst_11 = arith.constant dense<0.000000e+00> : vector<8xf32>
    %22 = vector.multi_reduction <add>, %21, %cst_11 [1] : vector<8x128xf32> to vector<8xf32>
    %23 = vector.shape_cast %22 : vector<8xf32> to vector<8x1xf32>
    %cst_12 = arith.constant 1.562500e-02 : f32
    %24 = vector.broadcast %cst_12 : f32 to vector<8x1xf32>
    %25 = arith.mulf %23, %24 : vector<8x1xf32>
    %26 = vector.broadcast %25 : vector<8x1xf32> to vector<8x128xf32>
    %27 = arith.subf %21, %26 : vector<8x128xf32>
    %c0_13 = arith.constant 0 : index
    %c0_14 = arith.constant 0 : index
    %28 = vector.load %arg7[%c0_13, %c0_14] : memref<1x128xf32, #tpu.memory_space<vmem>>, vector<1x128xf32>
    %29 = vector.broadcast %28 : vector<1x128xf32> to vector<8x128xf32>
    %30 = arith.mulf %27, %29 : vector<8x128xf32>
    %31 = arith.mulf %30, %30 : vector<8x128xf32>
    %cst_15 = arith.constant dense<0.000000e+00> : vector<8xf32>
    %32 = vector.multi_reduction <add>, %31, %cst_15 [1] : vector<8x128xf32> to vector<8xf32>
    %33 = vector.shape_cast %32 : vector<8xf32> to vector<8x1xf32>
    %cst_16 = arith.constant 1.562500e-02 : f32
    %34 = vector.broadcast %cst_16 : f32 to vector<8x1xf32>
    %35 = arith.mulf %33, %34 : vector<8x1xf32>
    %cst_17 = arith.constant 9.99999996E-13 : f32
    %36 = vector.broadcast %cst_17 : f32 to vector<8x1xf32>
    %37 = arith.addf %35, %36 : vector<8x1xf32>
    %38 = math.rsqrt %37 : vector<8x1xf32>
    %39 = vector.broadcast %38 : vector<8x1xf32> to vector<8x128xf32>
    %40 = arith.mulf %30, %39 : vector<8x128xf32>
    %c0_18 = arith.constant 0 : index
    %c0_19 = arith.constant 0 : index
    %41 = vector.load %arg5[%c0_18, %c0_19] : memref<1x128xf32, #tpu.memory_space<vmem>>, vector<1x128xf32>
    %42 = vector.broadcast %41 : vector<1x128xf32> to vector<8x128xf32>
    %43 = arith.mulf %42, %40 : vector<8x128xf32>
    %c0_20 = arith.constant 0 : index
    %c0_21 = arith.constant 0 : index
    %44 = vector.load %arg6[%c0_20, %c0_21] : memref<1x128xf32, #tpu.memory_space<vmem>>, vector<1x128xf32>
    %45 = vector.broadcast %44 : vector<1x128xf32> to vector<8x128xf32>
    %46 = arith.addf %43, %45 : vector<8x128xf32>
    %47 = arith.truncf %46 : vector<8x128xf32> to vector<8x128xbf16>
    %c0_22 = arith.constant 0 : index
    %c0_23 = arith.constant 0 : index
    %48 = vector.load %arg8[%c0_22, %c0_23] : memref<128x128xbf16, #tpu.memory_space<vmem>>, vector<128x128xbf16>
    %cst_24 = arith.constant dense<0.000000e+00> : vector<8x128xf32>
    %49 = tpu.matmul %47, %48, %cst_24 {dimension_numbers = #tpu.dot_dimension_numbers<[1], [0], [0], [1], [0, 0, 1, 1], [], []>} : vector<8x128xbf16>, vector<128x128xbf16>, vector<8x128xf32> -> vector<8x128xf32>
    %c0_25 = arith.constant 0 : index
    %c0_26 = arith.constant 0 : index
    %50 = vector.load %arg9[%c0_25, %c0_26] : memref<1x128xf32, #tpu.memory_space<vmem>>, vector<1x128xf32>
    %51 = vector.broadcast %50 : vector<1x128xf32> to vector<8x128xf32>
    %52 = arith.addf %49, %51 : vector<8x128xf32>
    %c0_27 = arith.constant 0 : index
    %c0_28 = arith.constant 0 : index
    %53 = vector.load %arg10[%c0_27, %c0_28] : memref<8x128xf32, #tpu.memory_space<vmem>>, vector<8x128xf32>
    tpu.vector_store %arg10[%c0_27, %c0_28], %52 {strides = array<i32>} : memref<8x128xf32, #tpu.memory_space<vmem>>, vector<8x128xf32>,
    return
  }
  func.func @transform_0(%arg0: i32) -> (i32, i32) {
    %c0_i32 = arith.constant 0 : i32
    %c0_i32_0 = arith.constant 0 : i32
    return %arg0, %c0_i32 : i32, i32
  }
  func.func @transform_1(%arg0: i32) -> (i32, i32) {
    %c0_i32 = arith.constant 0 : i32
    %c0_i32_0 = arith.constant 0 : i32
    return %arg0, %c0_i32 : i32, i32
  }
  func.func @transform_2(%arg0: i32) -> (i32, i32) {
    %c0_i32 = arith.constant 0 : i32
    %c0_i32_0 = arith.constant 0 : i32
    %c0_i32_1 = arith.constant 0 : i32
    return %c0_i32, %c0_i32_0 : i32, i32
  }
  func.func @transform_3(%arg0: i32) -> (i32, i32) {
    %c0_i32 = arith.constant 0 : i32
    %c0_i32_0 = arith.constant 0 : i32
    %c0_i32_1 = arith.constant 0 : i32
    return %c0_i32, %c0_i32_0 : i32, i32
  }
  func.func @transform_4(%arg0: i32) -> (i32, i32) {
    %c0_i32 = arith.constant 0 : i32
    %c0_i32_0 = arith.constant 0 : i32
    %c0_i32_1 = arith.constant 0 : i32
    return %c0_i32, %c0_i32_0 : i32, i32
  }
  func.func @transform_5(%arg0: i32) -> (i32, i32) {
    %c0_i32 = arith.constant 0 : i32
    %c0_i32_0 = arith.constant 0 : i32
    %c0_i32_1 = arith.constant 0 : i32
    return %c0_i32, %c0_i32_0 : i32, i32
  }
  func.func @transform_6(%arg0: i32) -> (i32, i32) {
    %c0_i32 = arith.constant 0 : i32
    %c0_i32_0 = arith.constant 0 : i32
    %c0_i32_1 = arith.constant 0 : i32
    return %c0_i32, %c0_i32_0 : i32, i32
  }
  func.func @transform_7(%arg0: i32) -> (i32, i32) {
    %c0_i32 = arith.constant 0 : i32
    %c0_i32_0 = arith.constant 0 : i32
    %c0_i32_1 = arith.constant 0 : i32
    return %c0_i32, %c0_i32_0 : i32, i32
  }
  func.func @transform_8(%arg0: i32) -> (i32, i32) {
    %c0_i32 = arith.constant 0 : i32
    %c0_i32_0 = arith.constant 0 : i32
    %c0_i32_1 = arith.constant 0 : i32
    return %c0_i32, %c0_i32_0 : i32, i32
  }
  func.func @transform_9(%arg0: i32) -> (i32, i32) {
    %c0_i32 = arith.constant 0 : i32
    %c0_i32_0 = arith.constant 0 : i32
    return %arg0, %c0_i32 : i32, i32
  }
}

</mosaic_0001>

<llo_original>
// kernel: tpu_custom_call.1
$region0: #{tpu_custom_call.1}
  #allocation0 [shape = 'u32[]', space=smem, size = 0x4, offset = 0x4, fixed_abs, tag = 'smem constant byte address 0x4 - core index']
  #allocation1 [shape = 'u32[144,128]{1,0:T(1,128)}', space=vmem, size = 0x12000, scoped, tag = 'internal scratch']
  %s0 = inlined_call_operand.hbm [shape: f32[8,128], index: 0, kind: input, shape index: {}]
  %s1 = inlined_call_operand.hbm [shape: f32[8,128], index: 1, kind: input, shape index: {}]
  %s2 = inlined_call_operand.hbm [shape: bf16[128,128], index: 2, kind: input, shape index: {}]
  %s3 = inlined_call_operand.vmem [shape: f32[1,128], index: 3, kind: input, shape index: {}]
  %s4 = inlined_call_operand.vmem [shape: f32[1,128], index: 4, kind: input, shape index: {}]
  %s5 = inlined_call_operand.vmem [shape: f32[1,128], index: 5, kind: input, shape index: {}]
  %s6 = inlined_call_operand.vmem [shape: f32[1,128], index: 6, kind: input, shape index: {}]
  %s7 = inlined_call_operand.hbm [shape: bf16[128,128], index: 7, kind: input, shape index: {}]
  %s8 = inlined_call_operand.vmem [shape: f32[1,128], index: 8, kind: input, shape index: {}]
  %s9 = inlined_call_operand.hbm [shape: f32[8,128], index: 9, kind: output, shape index: {}]
  %s10 = sld [smem:[#allocation0]]
  $region62: #{tpu_custom_call.1} parent=0
    _
  %s12 = ssub.s32 1, %s10
  %s13 = scalar_select 0, %s12, %s10
  $region1: #{tpu_custom_call.1} parent=0
    #allocation2 [shape = 'u8[4096]{0}', space=vmem, size = 0x1000, scoped, tag = 'input window, operand 0, single buffered']
    #allocation3 [shape = 's32[1]{0}', space=sflag, size = 0x4, scoped, tag = 'scoped memory for tpu_custom_call.1']
    #allocation4 [shape = 's32[1]{0}', space=sflag, size = 0x4, scoped, tag = 'scoped memory for tpu_custom_call.1']
    #allocation5 [shape = 'u8[4096]{0}', space=vmem, size = 0x1000, scoped, tag = 'input window, operand 1, single buffered']
    #allocation6 [shape = 's32[1]{0}', space=sflag, size = 0x4, scoped, tag = 'scoped memory for tpu_custom_call.1']
    #allocation7 [shape = 'u8[32768]{0}', space=vmem, size = 0x8000, scoped, tag = 'input window, operand 2, single buffered']
    #allocation8 [shape = 'u8[32768]{0}', space=vmem, size = 0x8000, scoped, tag = 'input window, operand 7, single buffered']
    #allocation9 [shape = 's32[1]{0}', space=sflag, size = 0x4, scoped, tag = 'scoped memory for tpu_custom_call.1']
    #allocation10 [shape = 'u8[4096]{0}', space=vmem, size = 0x1000, scoped, tag = 'output window, operand 0, single buffered']
    %14 = vsyncpa [#allocation3], 0
    %15 = vsyncpa [#allocation6], 0
    %16 = vsyncpa [#allocation9], 0
    %17 = vsyncpa [#allocation4], 0
    // Predicated region
    $region2: #{tpu_custom_call.1} parent=1 // pred_check
      _
    $region3: #{tpu_custom_call.1} parent=1 // pred_check_branch
      %19 = sbr.rel (0) target = $region5
    $region4: #{tpu_custom_call.1} parent=1 // pred_region
      %s21 = ssub.s32 128, 128
      %22 = vsyncadd [#allocation3], %s21
      %s24 = sshll.u32 [#allocation2], 4
      %s25 = int_to_ptr.vmem [resolvable:$true] %s24
      %27 = dma.hbm_to_vmem [thread:$0]  %s0, 128, %s25, [#allocation3]
    $region5: #{tpu_custom_call.1} parent=1 // pred_fallthru
      _
    // Predicated region
    $region6: #{tpu_custom_call.1} parent=1 // pred_check
      _
    $region7: #{tpu_custom_call.1} parent=1 // pred_check_branch
      %29 = sbr.rel (0) target = $region9
    $region8: #{tpu_custom_call.1} parent=1 // pred_region
      %s31 = ssub.s32 128, 128
      %32 = vsyncadd [#allocation6], %s31
      %s34 = sshll.u32 [#allocation5], 4
      %s35 = int_to_ptr.vmem [resolvable:$true] %s34
      %37 = dma.hbm_to_vmem [thread:$0]  %s1, 128, %s35, [#allocation6]
    $region9: #{tpu_custom_call.1} parent=1 // pred_fallthru
      _
    // Predicated region
    $region10: #{tpu_custom_call.1} parent=1 // pred_check
      _
    $region11: #{tpu_custom_call.1} parent=1 // pred_check_branch
      %39 = sbr.rel (0) target = $region13
    $region12: #{tpu_custom_call.1} parent=1 // pred_region
      %s41 = ssub.s32 1024, 1024
      %42 = vsyncadd [#allocation6], %s41
      %s43 = sshll.u32 [#allocation7], 4
      %s44 = int_to_ptr.vmem [resolvable:$true] %s43
      %49 = dma.hbm_to_vmem [thread:$0]  %s2, 1024, %s44, [#allocation6], 64, 64, 4
    $region13: #{tpu_custom_call.1} parent=1 // pred_fallthru
      _
    // Predicated region
    $region14: #{tpu_custom_call.1} parent=1 // pred_check
      _
    $region15: #{tpu_custom_call.1} parent=1 // pred_check_branch
      %51 = sbr.rel (0) target = $region17
    $region16: #{tpu_custom_call.1} parent=1 // pred_region
      _
    $region17: #{tpu_custom_call.1} parent=1 // pred_fallthru
      _
    // Predicated region
    $region18: #{tpu_custom_call.1} parent=1 // pred_check
      _
    $region19: #{tpu_custom_call.1} parent=1 // pred_check_branch
      %53 = sbr.rel (0) target = $region21
    $region20: #{tpu_custom_call.1} parent=1 // pred_region
      _
    $region21: #{tpu_custom_call.1} parent=1 // pred_fallthru
      _
    // Predicated region
    $region22: #{tpu_custom_call.1} parent=1 // pred_check
      _
    $region23: #{tpu_custom_call.1} parent=1 // pred_check_branch
      %55 = sbr.rel (0) target = $region25
    $region24: #{tpu_custom_call.1} parent=1 // pred_region
      _
    $region25: #{tpu_custom_call.1} parent=1 // pred_fallthru
      _
    // Predicated region
    $region26: #{tpu_custom_call.1} parent=1 // pred_check
      _
    $region27: #{tpu_custom_call.1} parent=1 // pred_check_branch
      %57 = sbr.rel (0) target = $region29
    $region28: #{tpu_custom_call.1} parent=1 // pred_region
      _
    $region29: #{tpu_custom_call.1} parent=1 // pred_fallthru
      _
    // Predicated region
    $region30: #{tpu_custom_call.1} parent=1 // pred_check
      _
    $region31: #{tpu_custom_call.1} parent=1 // pred_check_branch
      %59 = sbr.rel (0) target = $region33
    $region32: #{tpu_custom_call.1} parent=1 // pred_region
      %s61 = ssub.s32 1024, 1024
      %62 = vsyncadd [#allocation9], %s61
      %s63 = sshll.u32 [#allocation8], 4
      %s64 = int_to_ptr.vmem [resolvable:$true] %s63
      %69 = dma.hbm_to_vmem [thread:$0]  %s7, 1024, %s64, [#allocation9], 64, 64, 4
    $region33: #{tpu_custom_call.1} parent=1 // pred_fallthru
      _
    // Predicated region
    $region34: #{tpu_custom_call.1} parent=1 // pred_check
      _
    $region35: #{tpu_custom_call.1} parent=1 // pred_check_branch
      %71 = sbr.rel (0) target = $region37
    $region36: #{tpu_custom_call.1} parent=1 // pred_region
      _
    $region37: #{tpu_custom_call.1} parent=1 // pred_fallthru
      _
    // Predicated region
    $region38: #{tpu_custom_call.1} parent=1 // pred_check
      _
    $region39: #{tpu_custom_call.1} parent=1 // pred_check_branch
      %73 = sbr.rel (0) target = $region41
    $region40: #{tpu_custom_call.1} parent=1 // pred_region
      %74 = dma.done [#allocation3], 128
    $region41: #{tpu_custom_call.1} parent=1 // pred_fallthru
      _
    // Predicated region
    $region42: #{tpu_custom_call.1} parent=1 // pred_check
      _
    $region43: #{tpu_custom_call.1} parent=1 // pred_check_branch
      %76 = sbr.rel (0) target = $region45
    $region44: #{tpu_custom_call.1} parent=1 // pred_region
      %77 = dma.done [#allocation6], 128
    $region45: #{tpu_custom_call.1} parent=1 // pred_fallthru
      _
    // Predicated region
    $region46: #{tpu_custom_call.1} parent=1 // pred_check
      _
    $region47: #{tpu_custom_call.1} parent=1 // pred_check_branch
      %79 = sbr.rel (0) target = $region49
    $region48: #{tpu_custom_call.1} parent=1 // pred_region
      %80 = dma.done [#allocation6], 1024
    $region49: #{tpu_custom_call.1} parent=1 // pred_fallthru
      _
    // Predicated region
    $region50: #{tpu_custom_call.1} parent=1 // pred_check
      _
    $region51: #{tpu_custom_call.1} parent=1 // pred_check_branch
      %82 = sbr.rel (0) target = $region53
    $region52: #{tpu_custom_call.1} parent=1 // pred_region
      %83 = dma.done [#allocation9], 1024
    $region53: #{tpu_custom_call.1} parent=1 // pred_fallthru
      _
    %v85 = vld [vmem:[#allocation2] sm:$0xff]
    %v86 = vld [vmem:[#allocation5] sm:$0xff]
    %v87 = vmul.f32 %v85, %v86
    %v88 = vpack.c.bf16 %v87, %v87
    %v89 = vld [vmem:[#allocation7] sm:$0xf]
    %v90 = vld [vmem:[#allocation7 + $0x4] sm:$0xf]
    %v91 = vld [vmem:[#allocation7 + $0x8] sm:$0xf]
    %v92 = vld [vmem:[#allocation7 + $0xc] sm:$0xf]
    %v93 = vld [vmem:[#allocation7 + $0x10] sm:$0xf]
    %v94 = vld [vmem:[#allocation7 + $0x14] sm:$0xf]
    %v95 = vld [vmem:[#allocation7 + $0x18] sm:$0xf]
    %v96 = vld [vmem:[#allocation7 + $0x1c] sm:$0xf]
    %v97 = vld [vmem:[#allocation7 + $0x20] sm:$0xf]
    %v98 = vld [vmem:[#allocation7 + $0x24] sm:$0xf]
    %v99 = vld [vmem:[#allocation7 + $0x28] sm:$0xf]
    %v100 = vld [vmem:[#allocation7 + $0x2c] sm:$0xf]
    %v101 = vld [vmem:[#allocation7 + $0x30] sm:$0xf]
    %v102 = vld [vmem:[#allocation7 + $0x34] sm:$0xf]
    %v103 = vld [vmem:[#allocation7 + $0x38] sm:$0xf]
    %v104 = vld [vmem:[#allocation7 + $0x3c] sm:$0xf]
    %v105 = vld [vmem:[%s3] sm:$0x1]
    %v107 = vlaneseq
    %v108 = vshrl.u32 %v107, 7
    %v109 = vsub.s32 0, %v108
    %v110 = vrot.slane %v105, %v109
    %v128 = vunpack.c.l.b16 %v89
    %v129 = vunpack.c.l.b16 %v90
    %v130 = vunpack.c.l.b16 %v91
    %v131 = vunpack.c.l.b16 %v92
    %v132 = vunpack.c.l.b16 %v93
    %v133 = vunpack.c.l.b16 %v94
    %v134 = vunpack.c.l.b16 %v95
    %v135 = vunpack.c.l.b16 %v96
    %v136 = vunpack.c.l.b16 %v97
    %v137 = vunpack.c.l.b16 %v98
    %v138 = vunpack.c.l.b16 %v99
    %v139 = vunpack.c.l.b16 %v100
    %v140 = vunpack.c.l.b16 %v101
    %v141 = vunpack.c.l.b16 %v102
    %v142 = vunpack.c.l.b16 %v103
    %v143 = vunpack.c.l.b16 %v104
    %v144 = vpack.c.b16 %v129, %v128
    %v145 = vpack.c.b16 %v131, %v130
    %v146 = vpack.c.b16 %v133, %v132
    %v147 = vpack.c.b16 %v135, %v134
    %v148 = vpack.c.b16 %v137, %v136
    %v149 = vpack.c.b16 %v139, %v138
    %v150 = vpack.c.b16 %v141, %v140
    %v151 = vpack.c.b16 %v143, %v142
    %160 = vmatprep.subr.bf16.mxu0 0
    %161 = vmatpush1.bf16.msra.mxu0 %v151
    %162 = vmatprep.subr.bf16.mxu0 0
    %163 = vmatpush1.bf16.msra.mxu0 %v150
    %164 = vmatprep.subr.bf16.mxu0 0
    %165 = vmatpush1.bf16.msra.mxu0 %v149
    %166 = vmatprep.subr.bf16.mxu0 0
    %167 = vmatpush1.bf16.msra.mxu0 %v148
    %168 = vmatprep.subr.bf16.mxu0 0
    %169 = vmatpush1.bf16.msra.mxu0 %v147
    %170 = vmatprep.subr.bf16.mxu0 0
    %171 = vmatpush1.bf16.msra.mxu0 %v146
    %172 = vmatprep.subr.bf16.mxu0 0
    %173 = vmatpush1.bf16.msra.mxu0 %v145
    %174 = vmatprep.subr.bf16.mxu0 0
    %175 = vmatpush1.bf16.msra.mxu0 %v144
    %176 = vmatprep.subr.bf16.mxu0 0
    %177 = vmatpush2.bf16.msra.mxu0 0
    %178 = vmatprep.subr.bf16.mxu0 0
    %179 = vmatpush2.bf16.msra.mxu0 0
    %180 = vmatprep.subr.bf16.mxu0 0
    %181 = vmatpush2.bf16.msra.mxu0 0
    %182 = vmatprep.subr.bf16.mxu0 0
    %183 = vmatpush2.bf16.msra.mxu0 0
    %184 = vmatprep.subr.bf16.mxu0 0
    %185 = vmatpush2.bf16.msra.mxu0 0
    %186 = vmatprep.subr.bf16.mxu0 0
    %187 = vmatpush2.bf16.msra.mxu0 0
    %188 = vmatprep.subr.bf16.mxu0 0
    %189 = vmatpush2.bf16.msra.mxu0 0
    %190 = vmatprep.subr.bf16.mxu0 0
    %191 = vmatpush2.bf16.msra.mxu0 0
    %192 = vmatprep.mubr.bf16.mxu0 0
    %193 = vmatmul.mubr.bf16.gmra.mxu0 %v88
    %v194 = vpop.f32.mrf.mxu0
    %v195 = vadd.f32 %v110, %v194
    %v196 = vpop.f32.mrf.mxu0
    %v197 = vpop.f32.mrf.mxu0
    %v198 = vpop.f32.mrf.mxu0
    %199 = vdwg.mxu0
    %v200 = vmul.f32 %v195, %v195
    %v201 = vmul.f32 %v200, %v195
    %v202 = vmul.f32 %v201, 0.044715
    %v203 = vadd.f32 %v195, %v202
    %v204 = vmul.f32 %v203, 0.7978846
    %v205 = vmul.f32 %v195, 0.5
    %v206 = vtanh.pop %v204
    %v207 = vadd.f32 %v206, 1.0
    %v208 = vmul.f32 %v205, %v207
    %209 = vadd.xlane.f32.xlu0 %v208
    %v210 = vpop.xlane.xlu0 %209
    %v211 = vmul.f32 %v210, 0.015625
    %v212 = vsub.f32 %v208, %v211
    %v213 = vld [vmem:[%s6] sm:$0x1]
    %v215 = vlaneseq
    %v216 = vshrl.u32 %v215, 7
    %v217 = vsub.s32 0, %v216
    %v218 = vrot.slane %v213, %v217
    %v220 = vmul.f32 %v212, %v218
    %v221 = vmul.f32 %v220, %v220
    %222 = vadd.xlane.f32.xlu0 %v221
    %v223 = vpop.xlane.xlu0 %222
    %v224 = vmul.f32 %v223, 0.015625
    %v225 = vadd.f32 %v224, 1e-12
    %v226 = vrsqrt.pop %v225
    %v227 = vmul.f32 %v220, %v226
    %v228 = vld [vmem:[%s4] sm:$0x1]
    %v230 = vlaneseq
    %v231 = vshrl.u32 %v230, 7
    %v232 = vsub.s32 0, %v231
    %v233 = vrot.slane %v228, %v232
    %v235 = vmul.f32 %v233, %v227
    %v236 = vld [vmem:[%s5] sm:$0x1]
    %v238 = vlaneseq
    %v239 = vshrl.u32 %v238, 7
    %v240 = vsub.s32 0, %v239
    %v241 = vrot.slane %v236, %v240
    %v243 = vadd.f32 %v235, %v241
    %v244 = vpack.c.bf16 %v243, %v243
    %v245 = vld [vmem:[#allocation8] sm:$0xf]
    %v246 = vld [vmem:[#allocation8 + $0x4] sm:$0xf]
    %v247 = vld [vmem:[#allocation8 + $0x8] sm:$0xf]
    %v248 = vld [vmem:[#allocation8 + $0xc] sm:$0xf]
    %v249 = vld [vmem:[#allocation8 + $0x10] sm:$0xf]
    %v250 = vld [vmem:[#allocation8 + $0x14] sm:$0xf]
    %v251 = vld [vmem:[#allocation8 + $0x18] sm:$0xf]
    %v252 = vld [vmem:[#allocation8 + $0x1c] sm:$0xf]
    %v253 = vld [vmem:[#allocation8 + $0x20] sm:$0xf]
    %v254 = vld [vmem:[#allocation8 + $0x24] sm:$0xf]
    %v255 = vld [vmem:[#allocation8 + $0x28] sm:$0xf]
    %v256 = vld [vmem:[#allocation8 + $0x2c] sm:$0xf]
    %v257 = vld [vmem:[#allocation8 + $0x30] sm:$0xf]
    %v258 = vld [vmem:[#allocation8 + $0x34] sm:$0xf]
    %v259 = vld [vmem:[#allocation8 + $0x38] sm:$0xf]
    %v260 = vld [vmem:[#allocation8 + $0x3c] sm:$0xf]
    %v261 = vld [vmem:[%s8] sm:$0x1]
    %v263 = vlaneseq
    %v264 = vshrl.u32 %v263, 7
    %v265 = vsub.s32 0, %v264
    %v266 = vrot.slane %v261, %v265
    %v284 = vunpack.c.l.b16 %v245
    %v285 = vunpack.c.l.b16 %v246
    %v286 = vunpack.c.l.b16 %v247
    %v287 = vunpack.c.l.b16 %v248
    %v288 = vunpack.c.l.b16 %v249
    %v289 = vunpack.c.l.b16 %v250
    %v290 = vunpack.c.l.b16 %v251
    %v291 = vunpack.c.l.b16 %v252
    %v292 = vunpack.c.l.b16 %v253
    %v293 = vunpack.c.l.b16 %v254
    %v294 = vunpack.c.l.b16 %v255
    %v295 = vunpack.c.l.b16 %v256
    %v296 = vunpack.c.l.b16 %v257
    %v297 = vunpack.c.l.b16 %v258
    %v298 = vunpack.c.l.b16 %v259
    %v299 = vunpack.c.l.b16 %v260
    %v300 = vpack.c.b16 %v285, %v284
    %v301 = vpack.c.b16 %v287, %v286
    %v302 = vpack.c.b16 %v289, %v288
    %v303 = vpack.c.b16 %v291, %v290
    %v304 = vpack.c.b16 %v293, %v292
    %v305 = vpack.c.b16 %v295, %v294
    %v306 = vpack.c.b16 %v297, %v296
    %v307 = vpack.c.b16 %v299, %v298
    %316 = vmatprep.subr.bf16.mxu0 0
    %317 = vmatpush1.bf16.msra.mxu0 %v307
    %318 = vmatprep.subr.bf16.mxu0 0
    %319 = vmatpush1.bf16.msra.mxu0 %v306
    %320 = vmatprep.subr.bf16.mxu0 0
    %321 = vmatpush1.bf16.msra.mxu0 %v305
    %322 = vmatprep.subr.bf16.mxu0 0
    %323 = vmatpush1.bf16.msra.mxu0 %v304
    %324 = vmatprep.subr.bf16.mxu0 0
    %325 = vmatpush1.bf16.msra.mxu0 %v303
    %326 = vmatprep.subr.bf16.mxu0 0
    %327 = vmatpush1.bf16.msra.mxu0 %v302
    %328 = vmatprep.subr.bf16.mxu0 0
    %329 = vmatpush1.bf16.msra.mxu0 %v301
    %330 = vmatprep.subr.bf16.mxu0 0
    %331 = vmatpush1.bf16.msra.mxu0 %v300
    %332 = vmatprep.subr.bf16.mxu0 0
    %333 = vmatpush2.bf16.msra.mxu0 0
    %334 = vmatprep.subr.bf16.mxu0 0
    %335 = vmatpush2.bf16.msra.mxu0 0
    %336 = vmatprep.subr.bf16.mxu0 0
    %337 = vmatpush2.bf16.msra.mxu0 0
    %338 = vmatprep.subr.bf16.mxu0 0
    %339 = vmatpush2.bf16.msra.mxu0 0
    %340 = vmatprep.subr.bf16.mxu0 0
    %341 = vmatpush2.bf16.msra.mxu0 0
    %342 = vmatprep.subr.bf16.mxu0 0
    %343 = vmatpush2.bf16.msra.mxu0 0
    %344 = vmatprep.subr.bf16.mxu0 0
    %345 = vmatpush2.bf16.msra.mxu0 0
    %346 = vmatprep.subr.bf16.mxu0 0
    %347 = vmatpush2.bf16.msra.mxu0 0
    %348 = vmatprep.mubr.bf16.mxu0 0
    %349 = vmatmul.mubr.bf16.gmra.mxu0 %v244
    %v350 = vpop.f32.mrf.mxu0
    %v351 = vadd.f32 %v266, %v350
    %v352 = vpop.f32.mrf.mxu0
    %v353 = vpop.f32.mrf.mxu0
    %v354 = vpop.f32.mrf.mxu0
    %355 = vdwg.mxu0
    %356 = vst [vmem:[#allocation10] sm:$0xff] %v351
    // Predicated region
    $region54: #{tpu_custom_call.1} parent=1 // pred_check
      _
    $region55: #{tpu_custom_call.1} parent=1 // pred_check_branch
      %358 = sbr.rel (0) target = $region57
    $region56: #{tpu_custom_call.1} parent=1 // pred_region
      %s360 = ssub.s32 128, 128
      %361 = vsyncadd [#allocation4], %s360
      %s363 = sshll.u32 [#allocation10], 4
      %s364 = int_to_ptr.vmem [resolvable:$true] %s363
      %366 = dma.vmem_to_hbm [thread:$0]  %s364, 128, %s9, [#allocation4]
    $region57: #{tpu_custom_call.1} parent=1 // pred_fallthru
      _
    // Predicated region
    $region58: #{tpu_custom_call.1} parent=1 // pred_check
      _
    $region59: #{tpu_custom_call.1} parent=1 // pred_check_branch
      %368 = sbr.rel (0) target = $region61
    $region60: #{tpu_custom_call.1} parent=1 // pred_region
      %369 = dma.done [#allocation4], 128
    $region61: #{tpu_custom_call.1} parent=1 // pred_fallthru
      _
    %370 = vsyncpa [#allocation3], 1
    %371 = vsyncpa [#allocation6], 1
    %372 = vsyncpa [#allocation9], 1
    %373 = vsyncpa [#allocation4], 1

// kernel: tpu_custom_call.1
$region0: #{tpu_custom_call.1}
  #allocation0 [shape = 'u32[]', space=smem, size = 0x4, offset = 0x4, fixed_abs, tag = 'smem constant byte address 0x4 - core index']
  #allocation1 [shape = 'u32[144,128]{1,0:T(1,128)}', space=vmem, size = 0x12000, scoped, tag = 'internal scratch']
  %s0 = inlined_call_operand.hbm [shape: f32[8,128], index: 0, kind: input, shape index: {}]
  %s1 = inlined_call_operand.hbm [shape: f32[8,128], index: 1, kind: input, shape index: {}]
  %s2 = inlined_call_operand.hbm [shape: bf16[128,128], index: 2, kind: input, shape index: {}]
  %s3 = inlined_call_operand.vmem [shape: f32[1,128], index: 3, kind: input, shape index: {}]
  %s4 = inlined_call_operand.vmem [shape: f32[1,128], index: 4, kind: input, shape index: {}]
  %s5 = inlined_call_operand.vmem [shape: f32[1,128], index: 5, kind: input, shape index: {}]
  %s6 = inlined_call_operand.vmem [shape: f32[1,128], index: 6, kind: input, shape index: {}]
  %s7 = inlined_call_operand.hbm [shape: bf16[128,128], index: 7, kind: input, shape index: {}]
  %s8 = inlined_call_operand.vmem [shape: f32[1,128], index: 8, kind: input, shape index: {}]
  %s9 = inlined_call_operand.hbm [shape: f32[8,128], index: 9, kind: output, shape index: {}]
  %s10 = sld [smem:[#allocation0]]
  $region62: #{tpu_custom_call.1} parent=0
    _
  %s12 = ssub.s32 1, %s10
  %s13 = scalar_select 0, %s12, %s10
  $region1: #{tpu_custom_call.1} parent=0
    #allocation2 [shape = 'u8[4096]{0}', space=vmem, size = 0x1000, scoped, tag = 'input window, operand 0, single buffered']
    #allocation3 [shape = 's32[1]{0}', space=sflag, size = 0x4, scoped, tag = 'scoped memory for tpu_custom_call.1']
    #allocation4 [shape = 's32[1]{0}', space=sflag, size = 0x4, scoped, tag = 'scoped memory for tpu_custom_call.1']
    #allocation5 [shape = 'u8[4096]{0}', space=vmem, size = 0x1000, scoped, tag = 'input window, operand 1, single buffered']
    #allocation6 [shape = 's32[1]{0}', space=sflag, size = 0x4, scoped, tag = 'scoped memory for tpu_custom_call.1']
    #allocation7 [shape = 'u8[32768]{0}', space=vmem, size = 0x8000, scoped, tag = 'input window, operand 2, single buffered']
    #allocation8 [shape = 'u8[32768]{0}', space=vmem, size = 0x8000, scoped, tag = 'input window, operand 7, single buffered']
    #allocation9 [shape = 's32[1]{0}', space=sflag, size = 0x4, scoped, tag = 'scoped memory for tpu_custom_call.1']
    #allocation10 [shape = 'u8[4096]{0}', space=vmem, size = 0x1000, scoped, tag = 'output window, operand 0, single buffered']
    %14 = vsyncpa [#allocation3], 0
    %15 = vsyncpa [#allocation6], 0
    %16 = vsyncpa [#allocation9], 0
    %17 = vsyncpa [#allocation4], 0
    // Predicated region
    $region2: #{tpu_custom_call.1} parent=1 // pred_check
      _
    $region3: #{tpu_custom_call.1} parent=1 // pred_check_branch
      %19 = sbr.rel (0) target = $region5
    $region4: #{tpu_custom_call.1} parent=1 // pred_region
      %s21 = ssub.s32 128, 128
      %22 = vsyncadd [#allocation3], %s21
      %s24 = sshll.u32 [#allocation2], 4
      %s25 = int_to_ptr.vmem [resolvable:$true] %s24
      %27 = dma.hbm_to_vmem [thread:$0]  %s0, 128, %s25, [#allocation3]
    $region5: #{tpu_custom_call.1} parent=1 // pred_fallthru
      _
    // Predicated region
    $region6: #{tpu_custom_call.1} parent=1 // pred_check
      _
    $region7: #{tpu_custom_call.1} parent=1 // pred_check_branch
      %29 = sbr.rel (0) target = $region9
    $region8: #{tpu_custom_call.1} parent=1 // pred_region
      %s31 = ssub.s32 128, 128
      %32 = vsyncadd [#allocation6], %s31
      %s34 = sshll.u32 [#allocation5], 4
      %s35 = int_to_ptr.vmem [resolvable:$true] %s34
      %37 = dma.hbm_to_vmem [thread:$0]  %s1, 128, %s35, [#allocation6]
    $region9: #{tpu_custom_call.1} parent=1 // pred_fallthru
      _
    // Predicated region
    $region10: #{tpu_custom_call.1} parent=1 // pred_check
      _
    $region11: #{tpu_custom_call.1} parent=1 // pred_check_branch
      %39 = sbr.rel (0) target = $region13
    $region12: #{tpu_custom_call.1} parent=1 // pred_region
      %s41 = ssub.s32 1024, 1024
      %42 = vsyncadd [#allocation6], %s41
      %s43 = sshll.u32 [#allocation7], 4
      %s44 = int_to_ptr.vmem [resolvable:$true] %s43
      %49 = dma.hbm_to_vmem [thread:$0]  %s2, 1024, %s44, [#allocation6], 64, 64, 4
    $region13: #{tpu_custom_call.1} parent=1 // pred_fallthru
      _
    // Predicated region
    $region14: #{tpu_custom_call.1} parent=1 // pred_check
      _
    $region15: #{tpu_custom_call.1} parent=1 // pred_check_branch
      %51 = sbr.rel (0) target = $region17
    $region16: #{tpu_custom_call.1} parent=1 // pred_region
      _
    $region17: #{tpu_custom_call.1} parent=1 // pred_fallthru
      _
    // Predicated region
    $region18: #{tpu_custom_call.1} parent=1 // pred_check
      _
    $region19: #{tpu_custom_call.1} parent=1 // pred_check_branch
      %53 = sbr.rel (0) target = $region21
    $region20: #{tpu_custom_call.1} parent=1 // pred_region
      _
    $region21: #{tpu_custom_call.1} parent=1 // pred_fallthru
      _
    // Predicated region
    $region22: #{tpu_custom_call.1} parent=1 // pred_check
      _
    $region23: #{tpu_custom_call.1} parent=1 // pred_check_branch
      %55 = sbr.rel (0) target = $region25
    $region24: #{tpu_custom_call.1} parent=1 // pred_region
      _
    $region25: #{tpu_custom_call.1} parent=1 // pred_fallthru
      _
    // Predicated region
    $region26: #{tpu_custom_call.1} parent=1 // pred_check
      _
    $region27: #{tpu_custom_call.1} parent=1 // pred_check_branch
      %57 = sbr.rel (0) target = $region29
    $region28: #{tpu_custom_call.1} parent=1 // pred_region
      _
    $region29: #{tpu_custom_call.1} parent=1 // pred_fallthru
      _
    // Predicated region
    $region30: #{tpu_custom_call.1} parent=1 // pred_check
      _
    $region31: #{tpu_custom_call.1} parent=1 // pred_check_branch
      %59 = sbr.rel (0) target = $region33
    $region32: #{tpu_custom_call.1} parent=1 // pred_region
      %s61 = ssub.s32 1024, 1024
      %62 = vsyncadd [#allocation9], %s61
      %s63 = sshll.u32 [#allocation8], 4
      %s64 = int_to_ptr.vmem [resolvable:$true] %s63
      %69 = dma.hbm_to_vmem [thread:$0]  %s7, 1024, %s64, [#allocation9], 64, 64, 4
    $region33: #{tpu_custom_call.1} parent=1 // pred_fallthru
      _
    // Predicated region
    $region34: #{tpu_custom_call.1} parent=1 // pred_check
      _
    $region35: #{tpu_custom_call.1} parent=1 // pred_check_branch
      %71 = sbr.rel (0) target = $region37
    $region36: #{tpu_custom_call.1} parent=1 // pred_region
      _
    $region37: #{tpu_custom_call.1} parent=1 // pred_fallthru
      _
    // Predicated region
    $region38: #{tpu_custom_call.1} parent=1 // pred_check
      _
    $region39: #{tpu_custom_call.1} parent=1 // pred_check_branch
      %73 = sbr.rel (0) target = $region41
    $region40: #{tpu_custom_call.1} parent=1 // pred_region
      %74 = dma.done [#allocation3], 128
    $region41: #{tpu_custom_call.1} parent=1 // pred_fallthru
      _
    // Predicated region
    $region42: #{tpu_custom_call.1} parent=1 // pred_check
      _
    $region43: #{tpu_custom_call.1} parent=1 // pred_check_branch
      %76 = sbr.rel (0) target = $region45
    $region44: #{tpu_custom_call.1} parent=1 // pred_region
      %77 = dma.done [#allocation6], 128
    $region45: #{tpu_custom_call.1} parent=1 // pred_fallthru
      _
    // Predicated region
    $region46: #{tpu_custom_call.1} parent=1 // pred_check
      _
    $region47: #{tpu_custom_call.1} parent=1 // pred_check_branch
      %79 = sbr.rel (0) target = $region49
    $region48: #{tpu_custom_call.1} parent=1 // pred_region
      %80 = dma.done [#allocation6], 1024
    $region49: #{tpu_custom_call.1} parent=1 // pred_fallthru
      _
    // Predicated region
    $region50: #{tpu_custom_call.1} parent=1 // pred_check
      _
    $region51: #{tpu_custom_call.1} parent=1 // pred_check_branch
      %82 = sbr.rel (0) target = $region53
    $region52: #{tpu_custom_call.1} parent=1 // pred_region
      %83 = dma.done [#allocation9], 1024
    $region53: #{tpu_custom_call.1} parent=1 // pred_fallthru
      _
    %v85 = vld [vmem:[#allocation2] sm:$0xff]
    %v86 = vld [vmem:[#allocation5] sm:$0xff]
    %v87 = vmul.f32 %v85, %v86
    %v88 = vpack.c.bf16 %v87, %v87
    %v89 = vld [vmem:[#allocation7] sm:$0xf]
    %v90 = vld [vmem:[#allocation7 + $0x4] sm:$0xf]
    %v91 = vld [vmem:[#allocation7 + $0x8] sm:$0xf]
    %v92 = vld [vmem:[#allocation7 + $0xc] sm:$0xf]
    %v93 = vld [vmem:[#allocation7 + $0x10] sm:$0xf]
    %v94 = vld [vmem:[#allocation7 + $0x14] sm:$0xf]
    %v95 = vld [vmem:[#allocation7 + $0x18] sm:$0xf]
    %v96 = vld [vmem:[#allocation7 + $0x1c] sm:$0xf]
    %v97 = vld [vmem:[#allocation7 + $0x20] sm:$0xf]
    %v98 = vld [vmem:[#allocation7 + $0x24] sm:$0xf]
    %v99 = vld [vmem:[#allocation7 + $0x28] sm:$0xf]
    %v100 = vld [vmem:[#allocation7 + $0x2c] sm:$0xf]
    %v101 = vld [vmem:[#allocation7 + $0x30] sm:$0xf]
    %v102 = vld [vmem:[#allocation7 + $0x34] sm:$0xf]
    %v103 = vld [vmem:[#allocation7 + $0x38] sm:$0xf]
    %v104 = vld [vmem:[#allocation7 + $0x3c] sm:$0xf]
    %v105 = vld [vmem:[%s3] sm:$0x1]
    %v107 = vlaneseq
    %v108 = vshrl.u32 %v107, 7
    %v109 = vsub.s32 0, %v108
    %v110 = vrot.slane %v105, %v109
    %v128 = vunpack.c.l.b16 %v89
    %v129 = vunpack.c.l.b16 %v90
    %v130 = vunpack.c.l.b16 %v91
    %v131 = vunpack.c.l.b16 %v92
    %v132 = vunpack.c.l.b16 %v93
    %v133 = vunpack.c.l.b16 %v94
    %v134 = vunpack.c.l.b16 %v95
    %v135 = vunpack.c.l.b16 %v96
    %v136 = vunpack.c.l.b16 %v97
    %v137 = vunpack.c.l.b16 %v98
    %v138 = vunpack.c.l.b16 %v99
    %v139 = vunpack.c.l.b16 %v100
    %v140 = vunpack.c.l.b16 %v101
    %v141 = vunpack.c.l.b16 %v102
    %v142 = vunpack.c.l.b16 %v103
    %v143 = vunpack.c.l.b16 %v104
    %v144 = vpack.c.b16 %v129, %v128
    %v145 = vpack.c.b16 %v131, %v130
    %v146 = vpack.c.b16 %v133, %v132
    %v147 = vpack.c.b16 %v135, %v134
    %v148 = vpack.c.b16 %v137, %v136
    %v149 = vpack.c.b16 %v139, %v138
    %v150 = vpack.c.b16 %v141, %v140
    %v151 = vpack.c.b16 %v143, %v142
    %160 = vmatprep.subr.bf16.mxu0 0
    %161 = vmatpush1.bf16.msra.mxu0 %v151
    %162 = vmatprep.subr.bf16.mxu0 0
    %163 = vmatpush1.bf16.msra.mxu0 %v150
    %164 = vmatprep.subr.bf16.mxu0 0
    %165 = vmatpush1.bf16.msra.mxu0 %v149
    %166 = vmatprep.subr.bf16.mxu0 0
    %167 = vmatpush1.bf16.msra.mxu0 %v148
    %168 = vmatprep.subr.bf16.mxu0 0
    %169 = vmatpush1.bf16.msra.mxu0 %v147
    %170 = vmatprep.subr.bf16.mxu0 0
    %171 = vmatpush1.bf16.msra.mxu0 %v146
    %172 = vmatprep.subr.bf16.mxu0 0
    %173 = vmatpush1.bf16.msra.mxu0 %v145
    %174 = vmatprep.subr.bf16.mxu0 0
    %175 = vmatpush1.bf16.msra.mxu0 %v144
    %176 = vmatprep.subr.bf16.mxu0 0
    %177 = vmatpush2.bf16.msra.mxu0 0
    %178 = vmatprep.subr.bf16.mxu0 0
    %179 = vmatpush2.bf16.msra.mxu0 0
    %180 = vmatprep.subr.bf16.mxu0 0
    %181 = vmatpush2.bf16.msra.mxu0 0
    %182 = vmatprep.subr.bf16.mxu0 0
    %183 = vmatpush2.bf16.msra.mxu0 0
    %184 = vmatprep.subr.bf16.mxu0 0
    %185 = vmatpush2.bf16.msra.mxu0 0
    %186 = vmatprep.subr.bf16.mxu0 0
    %187 = vmatpush2.bf16.msra.mxu0 0
    %188 = vmatprep.subr.bf16.mxu0 0
    %189 = vmatpush2.bf16.msra.mxu0 0
    %190 = vmatprep.subr.bf16.mxu0 0
    %191 = vmatpush2.bf16.msra.mxu0 0
    %192 = vmatprep.mubr.bf16.mxu0 0
    %193 = vmatmul.mubr.bf16.gmra.mxu0 %v88
    %v194 = vpop.f32.mrf.mxu0
    %v195 = vadd.f32 %v110, %v194
    %v196 = vpop.f32.mrf.mxu0
    %v197 = vpop.f32.mrf.mxu0
    %v198 = vpop.f32.mrf.mxu0
    %199 = vdwg.mxu0
    %v200 = vmul.f32 %v195, %v195
    %v201 = vmul.f32 %v200, %v195
    %v202 = vmul.f32 %v201, 0.044715
    %v203 = vadd.f32 %v195, %v202
    %v204 = vmul.f32 %v203, 0.7978846
    %v205 = vmul.f32 %v195, 0.5
    %v206 = vtanh.pop %v204
    %v207 = vadd.f32 %v206, 1.0
    %v208 = vmul.f32 %v205, %v207
    %209 = vadd.xlane.f32.xlu0 %v208
    %v210 = vpop.xlane.xlu0 %209
    %v211 = vmul.f32 %v210, 0.015625
    %v212 = vsub.f32 %v208, %v211
    %v213 = vld [vmem:[%s6] sm:$0x1]
    %v215 = vlaneseq
    %v216 = vshrl.u32 %v215, 7
    %v217 = vsub.s32 0, %v216
    %v218 = vrot.slane %v213, %v217
    %v220 = vmul.f32 %v212, %v218
    %v221 = vmul.f32 %v220, %v220
    %222 = vadd.xlane.f32.xlu0 %v221
    %v223 = vpop.xlane.xlu0 %222
    %v224 = vmul.f32 %v223, 0.015625
    %v225 = vadd.f32 %v224, 1e-12
    %v226 = vrsqrt.pop %v225
    %v227 = vmul.f32 %v220, %v226
    %v228 = vld [vmem:[%s4] sm:$0x1]
    %v230 = vlaneseq
    %v231 = vshrl.u32 %v230, 7
    %v232 = vsub.s32 0, %v231
    %v233 = vrot.slane %v228, %v232
    %v235 = vmul.f32 %v233, %v227
    %v236 = vld [vmem:[%s5] sm:$0x1]
    %v238 = vlaneseq
    %v239 = vshrl.u32 %v238, 7
    %v240 = vsub.s32 0, %v239
    %v241 = vrot.slane %v236, %v240
    %v243 = vadd.f32 %v235, %v241
    %v244 = vpack.c.bf16 %v243, %v243
    %v245 = vld [vmem:[#allocation8] sm:$0xf]
    %v246 = vld [vmem:[#allocation8 + $0x4] sm:$0xf]
    %v247 = vld [vmem:[#allocation8 + $0x8] sm:$0xf]
    %v248 = vld [vmem:[#allocation8 + $0xc] sm:$0xf]
    %v249 = vld [vmem:[#allocation8 + $0x10] sm:$0xf]
    %v250 = vld [vmem:[#allocation8 + $0x14] sm:$0xf]
    %v251 = vld [vmem:[#allocation8 + $0x18] sm:$0xf]
    %v252 = vld [vmem:[#allocation8 + $0x1c] sm:$0xf]
    %v253 = vld [vmem:[#allocation8 + $0x20] sm:$0xf]
    %v254 = vld [vmem:[#allocation8 + $0x24] sm:$0xf]
    %v255 = vld [vmem:[#allocation8 + $0x28] sm:$0xf]
    %v256 = vld [vmem:[#allocation8 + $0x2c] sm:$0xf]
    %v257 = vld [vmem:[#allocation8 + $0x30] sm:$0xf]
    %v258 = vld [vmem:[#allocation8 + $0x34] sm:$0xf]
    %v259 = vld [vmem:[#allocation8 + $0x38] sm:$0xf]
    %v260 = vld [vmem:[#allocation8 + $0x3c] sm:$0xf]
    %v261 = vld [vmem:[%s8] sm:$0x1]
    %v263 = vlaneseq
    %v264 = vshrl.u32 %v263, 7
    %v265 = vsub.s32 0, %v264
    %v266 = vrot.slane %v261, %v265
    %v284 = vunpack.c.l.b16 %v245
    %v285 = vunpack.c.l.b16 %v246
    %v286 = vunpack.c.l.b16 %v247
    %v287 = vunpack.c.l.b16 %v248
    %v288 = vunpack.c.l.b16 %v249
    %v289 = vunpack.c.l.b16 %v250
    %v290 = vunpack.c.l.b16 %v251
    %v291 = vunpack.c.l.b16 %v252
    %v292 = vunpack.c.l.b16 %v253
    %v293 = vunpack.c.l.b16 %v254
    %v294 = vunpack.c.l.b16 %v255
    %v295 = vunpack.c.l.b16 %v256
    %v296 = vunpack.c.l.b16 %v257
    %v297 = vunpack.c.l.b16 %v258
    %v298 = vunpack.c.l.b16 %v259
    %v299 = vunpack.c.l.b16 %v260
    %v300 = vpack.c.b16 %v285, %v284
    %v301 = vpack.c.b16 %v287, %v286
    %v302 = vpack.c.b16 %v289, %v288
    %v303 = vpack.c.b16 %v291, %v290
    %v304 = vpack.c.b16 %v293, %v292
    %v305 = vpack.c.b16 %v295, %v294
    %v306 = vpack.c.b16 %v297, %v296
    %v307 = vpack.c.b16 %v299, %v298
    %316 = vmatprep.subr.bf16.mxu0 0
    %317 = vmatpush1.bf16.msra.mxu0 %v307
    %318 = vmatprep.subr.bf16.mxu0 0
    %319 = vmatpush1.bf16.msra.mxu0 %v306
    %320 = vmatprep.subr.bf16.mxu0 0
    %321 = vmatpush1.bf16.msra.mxu0 %v305
    %322 = vmatprep.subr.bf16.mxu0 0
    %323 = vmatpush1.bf16.msra.mxu0 %v304
    %324 = vmatprep.subr.bf16.mxu0 0
    %325 = vmatpush1.bf16.msra.mxu0 %v303
    %326 = vmatprep.subr.bf16.mxu0 0
    %327 = vmatpush1.bf16.msra.mxu0 %v302
    %328 = vmatprep.subr.bf16.mxu0 0
    %329 = vmatpush1.bf16.msra.mxu0 %v301
    %330 = vmatprep.subr.bf16.mxu0 0
    %331 = vmatpush1.bf16.msra.mxu0 %v300
    %332 = vmatprep.subr.bf16.mxu0 0
    %333 = vmatpush2.bf16.msra.mxu0 0
    %334 = vmatprep.subr.bf16.mxu0 0
    %335 = vmatpush2.bf16.msra.mxu0 0
    %336 = vmatprep.subr.bf16.mxu0 0
    %337 = vmatpush2.bf16.msra.mxu0 0
    %338 = vmatprep.subr.bf16.mxu0 0
    %339 = vmatpush2.bf16.msra.mxu0 0
    %340 = vmatprep.subr.bf16.mxu0 0
    %341 = vmatpush2.bf16.msra.mxu0 0
    %342 = vmatprep.subr.bf16.mxu0 0
    %343 = vmatpush2.bf16.msra.mxu0 0
    %344 = vmatprep.subr.bf16.mxu0 0
    %345 = vmatpush2.bf16.msra.mxu0 0
    %346 = vmatprep.subr.bf16.mxu0 0
    %347 = vmatpush2.bf16.msra.mxu0 0
    %348 = vmatprep.mubr.bf16.mxu0 0
    %349 = vmatmul.mubr.bf16.gmra.mxu0 %v244
    %v350 = vpop.f32.mrf.mxu0
    %v351 = vadd.f32 %v266, %v350
    %v352 = vpop.f32.mrf.mxu0
    %v353 = vpop.f32.mrf.mxu0
    %v354 = vpop.f32.mrf.mxu0
    %355 = vdwg.mxu0
    %356 = vst [vmem:[#allocation10] sm:$0xff] %v351
    // Predicated region
    $region54: #{tpu_custom_call.1} parent=1 // pred_check
      _
    $region55: #{tpu_custom_call.1} parent=1 // pred_check_branch
      %358 = sbr.rel (0) target = $region57
    $region56: #{tpu_custom_call.1} parent=1 // pred_region
      %s360 = ssub.s32 128, 128
      %361 = vsyncadd [#allocation4], %s360
      %s363 = sshll.u32 [#allocation10], 4
      %s364 = int_to_ptr.vmem [resolvable:$true] %s363
      %366 = dma.vmem_to_hbm [thread:$0]  %s364, 128, %s9, [#allocation4]
    $region57: #{tpu_custom_call.1} parent=1 // pred_fallthru
      _
    // Predicated region
    $region58: #{tpu_custom_call.1} parent=1 // pred_check
      _
    $region59: #{tpu_custom_call.1} parent=1 // pred_check_branch
      %368 = sbr.rel (0) target = $region61
    $region60: #{tpu_custom_call.1} parent=1 // pred_region
      %369 = dma.done [#allocation4], 128
    $region61: #{tpu_custom_call.1} parent=1 // pred_fallthru
      _
    %370 = vsyncpa [#allocation3], 1
    %371 = vsyncpa [#allocation6], 1
    %372 = vsyncpa [#allocation9], 1
    %373 = vsyncpa [#allocation4], 1

</llo_original>
